<compile_context>
chip_gen: v7x
topology: tpu7x:2x2x1
jax: 0.10.0
libtpu: 0.0.40
codegen_flags: <defaults>
</compile_context>

<pallas_src>
import numpy as np
import jax
import jax.numpy as jnp
from jax.experimental import pallas as pl
from jax.experimental.pallas import tpu as pltpu


def get_preprocess_shape(oldh: int, oldw: int, long_side_length: int):
    scale = long_side_length * 1.0 / max(oldh, oldw)
    newh, neww = oldh * scale, oldw * scale
    neww = int(neww + 0.5)
    newh = int(newh + 0.5)
    return (newh, neww)


def _bilinear_matrix(new_len: int, old_len: int) -> np.ndarray:
    """Row-interpolation matrix W (new_len, old_len): out = W @ in.

    Half-pixel centers, edge-clamped (PIL/torchvision bilinear upscale)."""
    W = np.zeros((new_len, old_len), dtype=np.float32)
    if old_len == 1:
        W[:, 0] = 1.0
        return W
    scale = old_len / new_len
    for i in range(new_len):
        src = (i + 0.5) * scale - 0.5
        src = min(max(src, 0.0), old_len - 1.0)
        i0 = int(np.floor(src))
        i1 = min(i0 + 1, old_len - 1)
        frac = src - i0
        W[i, i0] += 1.0 - frac
        W[i, i1] += frac
    return W


def _resize_kernel(img_ref, rh_ref, rwt_ref, out_ref):
    # img_ref : (H, W)       uint8  -- one channel plane (cast in-kernel)
    # rh_ref  : (TM, H)      f32    -- row-interp rows for this output tile
    # rwt_ref : (W, newW)    f32    -- column-interp matrix, transposed
    # out_ref : (TM, newW)   uint8
    img = img_ref[...].astype(jnp.float32)
    tmp = jnp.dot(rh_ref[...], img,
                  preferred_element_type=jnp.float32,
                  precision=jax.lax.Precision.HIGHEST)
    out = jnp.dot(tmp, rwt_ref[...],
                  preferred_element_type=jnp.float32,
                  precision=jax.lax.Precision.HIGHEST)
    # Fused round-half-up + clip + uint8 cast (VPU work hidden under the MXU).
    out = jnp.clip(jnp.floor(out + 0.5), 0.0, 255.0)
    out_ref[...] = out.astype(jnp.int32).astype(jnp.uint8)


def resize_longest_side(image_u8_hwc: jax.Array, size: int) -> jax.Array:
    """image_u8_hwc: (H, W, C) uint8 -> (newH, newW, C) uint8."""
    H, W, C = image_u8_hwc.shape
    newh, neww = get_preprocess_shape(H, W, size)

    rh = jnp.asarray(_bilinear_matrix(newh, H))              # (newH, H)  f32
    rwt = jnp.asarray(_bilinear_matrix(neww, W).T)           # (W, newW)  f32
    img_chw = jnp.transpose(image_u8_hwc, (2, 0, 1))          # (C, H, W)  uint8

    # Row tile: full newH if small, else 128 (multiple of 8); the ragged last
    # tile is handled by Pallas edge padding + masked stores.
    tm = newh if newh <= 128 else 128
    n_row_tiles = pl.cdiv(newh, tm)

    out_chw = pl.pallas_call(
        _resize_kernel,
        out_shape=jax.ShapeDtypeStruct((C, newh, neww), jnp.uint8),
        grid_spec=pltpu.PrefetchScalarGridSpec(
            num_scalar_prefetch=0,
            grid=(C, n_row_tiles),
            in_specs=[
                # one uint8 channel plane, constant across row tiles
                pl.BlockSpec((None, H, W), lambda c, r: (c, 0, 0)),
                # row-interp rows for this output tile
                pl.BlockSpec((tm, H), lambda c, r: (r, 0)),
                # column-interp matrix (grid-constant, stays resident in VMEM)
                pl.BlockSpec((W, neww), lambda c, r: (0, 0)),
            ],
            out_specs=pl.BlockSpec((None, tm, neww), lambda c, r: (c, r, 0)),
        ),
        compiler_params=pltpu.CompilerParams(
            dimension_semantics=("parallel", "parallel"),
            # Explicit VMEM budget: above v5e/v6e's default scoped limit,
            # within v7x's 64 MiB physical VMEM.
            vmem_limit_bytes=48 * 1024 * 1024,
        ),
    )(img_chw, rh, rwt)

    return jnp.transpose(out_chw, (1, 2, 0))  # (newH, newW, C) uint8


if __name__ == "__main__":
    key = jax.random.PRNGKey(0)
    H, W, C = 16, 12, 3          # small HWC image, like a PIL RGB image
    size = 24                    # longest-side target
    image = jax.random.randint(key, (H, W, C), 0, 256,
                               dtype=jnp.int32).astype(jnp.uint8)

    out = jax.block_until_ready(resize_longest_side(image, size))

    newh, neww = get_preprocess_shape(H, W, size)
    assert out.shape == (newh, neww, C), (out.shape, (newh, neww, C))
    assert out.dtype == jnp.uint8

    # Reference: numpy float64 separable bilinear with identical weights.
    # Allow 1 uint8 LSB of slack for matmul accumulation-order / tie rounding
    # differences between the TPU matmul path and float64.
    rh_np = _bilinear_matrix(newh, H).astype(np.float64)
    rw_np = _bilinear_matrix(neww, W).astype(np.float64)
    img_np = np.asarray(image).astype(np.float64)
    ref = np.einsum("ah,hwc,bw->abc", rh_np, img_np, rw_np)
    ref_u8 = np.clip(np.floor(ref + 0.5), 0, 255).astype(np.uint8)

    diff = np.abs(np.asarray(out).astype(np.int32) - ref_u8.astype(np.int32))
    assert int(diff.max()) <= 1, f"max abs diff {int(diff.max())} > 1"

    print("KERNEL_OK")
</pallas_src>

<mosaic_0001>
module attributes {stable_mosaic.version = 11 : i64} {
  func.func @_resize_kernel(%arg0: i32, %arg1: i32, %arg2: memref<1x16x12xi8, #tpu.memory_space<vmem>>, %arg3: memref<24x16xf32, #tpu.memory_space<vmem>>, %arg4: memref<12x18xf32, #tpu.memory_space<vmem>>, %arg5: memref<1x24x18xi8, #tpu.memory_space<vmem>>) attributes {dimension_semantics = [#tpu.dimension_semantics<parallel>, #tpu.dimension_semantics<parallel>], iteration_bounds = array<i64: 3, 1>, scalar_prefetch = 0 : i64, scratch_operands = 0 : i64, tpu.core_type = #tpu.core_type<tc>, window_params = [{transform_indices = @transform_0, window_bounds = array<i64: 1, 16, 12>}, {transform_indices = @transform_1, window_bounds = array<i64: 24, 16>}, {pipeline_mode = #tpu.pipeline_mode<synchronous>, transform_indices = @transform_2, window_bounds = array<i64: 12, 18>}, {transform_indices = @transform_3, window_bounds = array<i64: 1, 24, 18>}]} {
    %c0 = arith.constant 0 : index
    %c0_0 = arith.constant 0 : index
    %c0_1 = arith.constant 0 : index
    %0 = vector.load %arg2[%c0, %c0_0, %c0_1] : memref<1x16x12xi8, #tpu.memory_space<vmem>>, vector<1x16x12xi8>
    %1 = vector.shape_cast %0 : vector<1x16x12xi8> to vector<16x12xi8>
    %2 = arith.uitofp %1 : vector<16x12xi8> to vector<16x12xf32>
    %c0_2 = arith.constant 0 : index
    %c0_3 = arith.constant 0 : index
    %3 = vector.load %arg3[%c0_2, %c0_3] : memref<24x16xf32, #tpu.memory_space<vmem>>, vector<24x16xf32>
    %cst = arith.constant dense<0.000000e+00> : vector<24x12xf32>
    %4 = tpu.matmul %3, %2, %cst {dimension_numbers = #tpu.dot_dimension_numbers<[1], [0], [0], [1], [0, 0, 1, 1], [], []>, precision = #tpu.contract_precision<fp32>} : vector<24x16xf32>, vector<16x12xf32>, vector<24x12xf32> -> vector<24x12xf32>
    %c0_4 = arith.constant 0 : index
    %c0_5 = arith.constant 0 : index
    %5 = vector.load %arg4[%c0_4, %c0_5] : memref<12x18xf32, #tpu.memory_space<vmem>>, vector<12x18xf32>
    %cst_6 = arith.constant dense<0.000000e+00> : vector<24x18xf32>
    %6 = tpu.matmul %4, %5, %cst_6 {dimension_numbers = #tpu.dot_dimension_numbers<[1], [0], [0], [1], [0, 0, 1, 1], [], []>, precision = #tpu.contract_precision<fp32>} : vector<24x12xf32>, vector<12x18xf32>, vector<24x18xf32> -> vector<24x18xf32>
    %cst_7 = arith.constant 5.000000e-01 : f32
    %7 = vector.broadcast %cst_7 : f32 to vector<24x18xf32>
    %8 = arith.addf %6, %7 : vector<24x18xf32>
    %9 = math.floor %8 : vector<24x18xf32>
    %cst_8 = arith.constant 0.000000e+00 : f32
    %cst_9 = arith.constant 2.550000e+02 : f32
    %10 = vector.broadcast %cst_8 : f32 to vector<24x18xf32>
    %11 = arith.maximumf %10, %9 : vector<24x18xf32>
    %12 = vector.broadcast %cst_9 : f32 to vector<24x18xf32>
    %13 = arith.minimumf %12, %11 : vector<24x18xf32>
    %14 = arith.fptosi %13 : vector<24x18xf32> to vector<24x18xi32>
    %15 = arith.trunci %14 : vector<24x18xi32> to vector<24x18xi8>
    %c0_10 = arith.constant 0 : index
    %c0_11 = arith.constant 0 : index
    %c0_12 = arith.constant 0 : index
    %16 = vector.load %arg5[%c0_10, %c0_11, %c0_12] : memref<1x24x18xi8, #tpu.memory_space<vmem>>, vector<1x24x18xi8>
    %17 = vector.shape_cast %16 : vector<1x24x18xi8> to vector<24x18xi8>
    %18 = vector.shape_cast %15 : vector<24x18xi8> to vector<1x24x18xi8>
    tpu.vector_store %arg5[%c0_10, %c0_11, %c0_12], %18 {strides = array<i32>} : memref<1x24x18xi8, #tpu.memory_space<vmem>>, vector<1x24x18xi8>,
    return
  }
  func.func @transform_0(%arg0: i32, %arg1: i32) -> (i32, i32, i32) {
    %c0_i32 = arith.constant 0 : i32
    %c0_i32_0 = arith.constant 0 : i32
    %c0_i32_1 = arith.constant 0 : i32
    return %arg0, %c0_i32, %c0_i32_0 : i32, i32, i32
  }
  func.func @transform_1(%arg0: i32, %arg1: i32) -> (i32, i32) {
    %c0_i32 = arith.constant 0 : i32
    %c0_i32_0 = arith.constant 0 : i32
    return %arg1, %c0_i32 : i32, i32
  }
  func.func @transform_2(%arg0: i32, %arg1: i32) -> (i32, i32) {
    %c0_i32 = arith.constant 0 : i32
    %c0_i32_0 = arith.constant 0 : i32
    %c0_i32_1 = arith.constant 0 : i32
    return %c0_i32, %c0_i32_0 : i32, i32
  }
  func.func @transform_3(%arg0: i32, %arg1: i32) -> (i32, i32, i32) {
    %c0_i32 = arith.constant 0 : i32
    %c0_i32_0 = arith.constant 0 : i32
    return %arg0, %arg1, %c0_i32 : i32, i32, i32
  }
}

</mosaic_0001>

<llo_original>
// kernel: tpu_custom_call.1
$region0: #{tpu_custom_call.1}
  #allocation0 [shape = 'u32[]', space=smem, size = 0x4, offset = 0x4, fixed_abs, tag = 'smem constant byte address 0x4 - core index']
  #allocation1 [shape = 'u32[144,128]{1,0:T(1,128)}', space=vmem, size = 0x12000, scoped, tag = 'internal scratch']
  %s0 = inlined_call_operand.vmem [shape: u8[3,16,12], index: 0, kind: input, shape index: {}]
  %s1 = inlined_call_operand.vmem [shape: f32[24,16], index: 1, kind: input, shape index: {}]
  %s2 = inlined_call_operand.vmem [shape: f32[12,18], index: 2, kind: input, shape index: {}]
  %s3 = inlined_call_operand.hbm [shape: u8[3,24,18], index: 3, kind: output, shape index: {}]
  %s4 = sld [smem:[#allocation0]]
  $region45: #{tpu_custom_call.1} parent=0
    _
  %s6 = ssub.s32 1, %s4
  %s7 = scalar_select 0, %s6, %s4
  $region1: #{tpu_custom_call.1} parent=0
    #allocation2 [shape = 'u8[6144]{0}', space=vmem, size = 0x1800, scoped, tag = 'output window, operand 0']
    #allocation3 [shape = 's32[2]{0}', space=sflag, size = 0x8, scoped, tag = 'scoped memory for tpu_custom_call.1']
    %8 = vsyncpa [#allocation3], 0
    %s9 = scalar_lea.sflag [#allocation3], 1
    %10 = vsyncpa %s9, 0
    loop: start=0, step=1, limit=5
    $region2: #{tpu_custom_call.1} parent=1 // loop_pre_header
      _
    $region3: #{tpu_custom_call.1} parent=1 // loop_header
      %s12 = sphi 0, %s16
      %p13 = scmp.ge.s32.totalorder %s12, 5
      %s19 = sphi 0, %s31
      %s20 = sphi 0, %s27
      %s21 = sphi 0, %s19
      %s22 = sphi 0, %s20
      %s23 = sphi 0, %s21
      %s24 = sphi 0, %s22
      %s34 = sphi 0, %s36
      %s37 = sphi 0, %s34
      %s38 = sphi 0, %s37
      %s54 = sphi 0, %s38
      %s60 = sphi 0, %s62
      %s63 = sphi 0, %s60
      %s64 = sphi 0, %s63
      %s80 = sphi 0, %s64
      %s84 = sphi 0, %s84
      %s86 = sphi 0, %s84
      %s87 = sphi 0, %s86
      %s101 = sphi 0, %s87
      %s109 = sphi 0, %s111
      %s112 = sphi 0, %s109
      %s113 = sphi 0, %s112
      %s129 = sphi 0, %s113
    $region4: #{tpu_custom_call.1} parent=1 // loop_header_branch
      %15 = sbr.rel (%p13) target = $region8
    $region5: #{tpu_custom_call.1} parent=1 // loop_body
      %s17 = ssub.s32 %s12, 1
      %s18 = ssub.s32 %s12, 2
      %s25 = sadd.s32 1, %s20
      %p26 = scmp.ge.s32.totalorder %s25, 1
      %s27 = scalar_select %p26, 0, %s25
      %s28 = sadd.s32 1, %s19
      %s29 = scalar_select %p26, %s28, %s19
      %p30 = scmp.ge.s32.totalorder %s29, 3
      %s31 = scalar_select %p30, 0, %s29
      %s32 = ssub.s32 %s19, %s31
      %p33 = scmp.eq.s32.totalorder %s32, 0
      %s35 = sadd.s32 %s34, 1
      %s36 = scalar_select %p33, %s34, %s35
      %p39 = pneg %p33
      %p40 = scmp.eq.s32.totalorder %s12, 2
      %p41 = por %p39, %p40
      %p42 = scmp.ne.s32.totalorder %s34, %s37
      %p43 = scmp.eq.s32.totalorder %s12, 0
      %p44 = por %p42, %p43
      %p45 = scmp.ne.s32.totalorder %s34, %s37
      %p46 = scmp.eq.s32.totalorder %s17, 2
      %p47 = por %p45, %p46
      %p48 = scmp.ne.s32.totalorder %s37, %s38
      %p49 = scmp.eq.s32.totalorder %s17, 0
      %p50 = por %p48, %p49
      %p51 = scmp.ne.s32.totalorder %s37, %s38
      %p52 = scmp.eq.s32.totalorder %s18, 2
      %p53 = por %p51, %p52
      %p55 = scmp.ne.s32.totalorder %s38, %s54
      %p56 = scmp.eq.s32.totalorder %s18, 0
      %p57 = por %p55, %p56
      %s58 = ssub.s32 %s20, %s27
      %p59 = scmp.eq.s32.totalorder %s58, 0
      %s61 = sadd.s32 %s60, 1
      %s62 = scalar_select %p59, %s60, %s61
      %p65 = pneg %p59
      %p66 = scmp.eq.s32.totalorder %s12, 2
      %p67 = por %p65, %p66
      %p68 = scmp.ne.s32.totalorder %s60, %s63
      %p69 = scmp.eq.s32.totalorder %s12, 0
      %p70 = por %p68, %p69
      %p71 = scmp.ne.s32.totalorder %s60, %s63
      %p72 = scmp.eq.s32.totalorder %s17, 2
      %p73 = por %p71, %p72
      %p74 = scmp.ne.s32.totalorder %s63, %s64
      %p75 = scmp.eq.s32.totalorder %s17, 0
      %p76 = por %p74, %p75
      %p77 = scmp.ne.s32.totalorder %s63, %s64
      %p78 = scmp.eq.s32.totalorder %s18, 2
      %p79 = por %p77, %p78
      %p81 = scmp.ne.s32.totalorder %s64, %s80
      %p82 = scmp.eq.s32.totalorder %s18, 0
      %p83 = por %p81, %p82
      %s85 = sadd.s32 %s84, 1
      %p88 = scmp.eq.s32.totalorder %s12, 2
      %p89 = scmp.ne.s32.totalorder %s84, %s86
      %p90 = scmp.eq.s32.totalorder %s12, 0
      %p91 = por %p89, %p90
      %p92 = scmp.ne.s32.totalorder %s84, %s86
      %p93 = scmp.eq.s32.totalorder %s17, 2
      %p94 = por %p92, %p93
      %p95 = scmp.ne.s32.totalorder %s86, %s87
      %p96 = scmp.eq.s32.totalorder %s17, 0
      %p97 = por %p95, %p96
      %p98 = scmp.ne.s32.totalorder %s86, %s87
      %p99 = scmp.eq.s32.totalorder %s18, 2
      %p100 = por %p98, %p99
      %p102 = scmp.ne.s32.totalorder %s87, %s101
      %p103 = scmp.eq.s32.totalorder %s18, 0
      %p104 = por %p102, %p103
      %s105 = ssub.s32 %s19, %s31
      %s106 = ssub.s32 %s20, %s27
      %s107 = sor.u32 %s105, %s106
      %p108 = scmp.eq.s32.totalorder %s107, 0
      %s110 = sadd.s32 %s109, 1
      %s111 = scalar_select %p108, %s109, %s110
      %p114 = pneg %p108
      %p115 = scmp.eq.s32.totalorder %s12, 2
      %p116 = por %p114, %p115
      %p117 = scmp.ne.s32.totalorder %s109, %s112
      %p118 = scmp.eq.s32.totalorder %s12, 0
      %p119 = por %p117, %p118
      %p120 = scmp.ne.s32.totalorder %s109, %s112
      %p121 = scmp.eq.s32.totalorder %s17, 2
      %p122 = por %p120, %p121
      %p123 = scmp.ne.s32.totalorder %s112, %s113
      %p124 = scmp.eq.s32.totalorder %s17, 0
      %p125 = por %p123, %p124
      %p126 = scmp.ne.s32.totalorder %s112, %s113
      %p127 = scmp.eq.s32.totalorder %s18, 2
      %p128 = por %p126, %p127
      %p130 = scmp.ne.s32.totalorder %s113, %s129
      %p131 = scmp.eq.s32.totalorder %s18, 0
      %p132 = por %p130, %p131
      %p133 = scmp.le.s32.totalorder 1, %s12
      %p134 = scmp.lt.s32.totalorder %s12, 4
      %p135 = pnand %p133, %p134
      %p136 = pneg %p135
      // Predicated region
      $region9: #{tpu_custom_call.1} parent=5 // pred_check
        _
      $region10: #{tpu_custom_call.1} parent=5 // pred_check_branch
        %138 = sbr.rel (%p135) target = $region12
      $region11: #{tpu_custom_call.1} parent=5 // pred_region
        %s139 = ssub.s32 %s12, 1
        // Predicated region
        $region13: #{tpu_custom_call.1} parent=11 // pred_check
          %p140 = pneg %p76
        $region14: #{tpu_custom_call.1} parent=11 // pred_check_branch
          %142 = sbr.rel (%p140) target = $region16
        $region15: #{tpu_custom_call.1} parent=11 // pred_region
          %s143 = smul.u32 3, %s22
          %p144 = scmp.lt.s32.totalorder %s143, 2
          %s145 = scalar_select %p144, %s143, 2
          %s146 = smul.addr %s145, 8
          %s147 = scalar_lea.vmem %s1, %s146
          %s148 = smul.u32 3, %s22
        $region16: #{tpu_custom_call.1} parent=11 // pred_fallthru
          _
        // Predicated region
        $region17: #{tpu_custom_call.1} parent=11 // pred_check
          %p149 = pneg %p97
        $region18: #{tpu_custom_call.1} parent=11 // pred_check_branch
          %151 = sbr.rel (%p149) target = $region20
        $region19: #{tpu_custom_call.1} parent=11 // pred_region
          _
        $region20: #{tpu_custom_call.1} parent=11 // pred_fallthru
          _
      $region12: #{tpu_custom_call.1} parent=5 // pred_fallthru
        _
      %p152 = scmp.lt.s32.totalorder %s12, 3
      // Predicated region
      $region21: #{tpu_custom_call.1} parent=5 // pred_check
        %p153 = pneg %p152
      $region22: #{tpu_custom_call.1} parent=5 // pred_check_branch
        %155 = sbr.rel (%p153) target = $region24
      $region23: #{tpu_custom_call.1} parent=5 // pred_region
        // Predicated region
        $region25: #{tpu_custom_call.1} parent=23 // pred_check
          %p156 = pneg %p44
        $region26: #{tpu_custom_call.1} parent=23 // pred_check_branch
          %158 = sbr.rel (%p156) target = $region28
        $region27: #{tpu_custom_call.1} parent=23 // pred_region
          %p159 = scmp.lt.s32.totalorder %s19, 2
          %s160 = scalar_select %p159, %s19, 2
          %s161 = smul.addr %s160, 2
          %s162 = smul.addr %s161, 2
          %s163 = scalar_lea.vmem %s0, %s162
        $region28: #{tpu_custom_call.1} parent=23 // pred_fallthru
          _
      $region24: #{tpu_custom_call.1} parent=5 // pred_fallthru
        _
      %p164 = scmp.le.s32.totalorder 1, %s12
      %p165 = scmp.lt.s32.totalorder %s12, 4
      %p166 = pnand %p164, %p165
      %p167 = pneg %p166
      // Predicated region
      $region29: #{tpu_custom_call.1} parent=5 // pred_check
        _
      $region30: #{tpu_custom_call.1} parent=5 // pred_check_branch
        %169 = sbr.rel (%p166) target = $region32
      $region31: #{tpu_custom_call.1} parent=5 // pred_region
        %s170 = ssub.s32 %s12, 1
        %p171 = scmp.lt.s32.totalorder %s21, 2
        %s172 = scalar_select %p171, %s21, 2
        %s173 = smul.addr %s172, 2
        %s174 = smul.addr %s173, 2
        %s175 = scalar_lea.vmem %s0, %s174
        %p176 = pneg %p50
        %p177 = pneg %p47
        %s178 = smul.u32 3, %s22
        %p179 = scmp.lt.s32.totalorder %s178, 2
        %s180 = scalar_select %p179, %s178, 2
        %s181 = smul.addr %s180, 8
        %s182 = scalar_lea.vmem %s1, %s181
        %p183 = pneg %p76
        %p184 = pneg %p73
        %p185 = pneg %p97
        %p186 = pneg %p94
        %p187 = pneg %p125
        %p188 = pneg %p122
        %s189 = sand.u32 %s112, 1
        %s190 = scalar_lea.sflag [#allocation3], %s189
        %s191 = sand.u32 %s112, 1
        %s192 = smul.addr %s191, 6
        %s193 = scalar_lea.vmem [#allocation2], %s192
        %p194 = scmp.lt.s32.totalorder %s21, 2
        %s195 = scalar_select %p194, %s21, 2
        %s196 = smul.addr %s195, 2
        %s197 = smul.addr %s196, 2
        %s198 = scalar_lea.vmem %s0, %s197
        %s199 = smul.u32 3, %s22
        %p200 = scmp.lt.s32.totalorder %s199, 2
        %s201 = scalar_select %p200, %s199, 2
        %s202 = smul.addr %s201, 8
        %s203 = scalar_lea.vmem %s1, %s202
        %s204 = smul.u32 3, %s22
        %s205 = smul.u32 3, %s22
        %v206 = vld [vmem:[%s198] sm:$0x3]
        %v207 = vld [vmem:[%s198 + $0x2] sm:$0x3]
        %v208 = vunpack.c.0.s8 %v206
        %v209 = vunpack.c.0.s8 %v207
        %v210 = vand.u32 %v208, 255
        %v211 = vand.u32 %v209, 255
        %v212 = vcvt.s32.f32 %v210
        %v213 = vcvt.s32.f32 %v211
        %v214 = vld [vmem:[%s203] sm:$0xff]
        %v215 = vld [vmem:[%s203 + $0x8] sm:$0xff]
        %v216 = vld [vmem:[%s203 + $0x10] sm:$0xff]
        %vm217 = vcmask 130048
        %v219 = vsel %vm217, %v214, 0
        %v222 = vsel %vm217, %v215, 0
        %v225 = vsel %vm217, %v216, 0
        %227 = vmatprep.subr.mxu0 0.0
        %v228 = vand.u32 %v212, 4294901760
        %229 = vmatpush1.msra.mxu0 %v228
        %230 = vmatprep.subr.mxu0 0.0
        %v231 = vand.u32 %v213, 4294901760
        %232 = vmatpush1.msra.mxu0 %v231
        %233 = vmatprep.subr.mxu0 0.0
        %234 = vmatpush1.msra.mxu0 0.0
        %235 = vmatprep.subr.mxu0 0.0
        %236 = vmatpush1.msra.mxu0 0.0
        %237 = vmatprep.subr.mxu0 0.0
        %238 = vmatpush1.msra.mxu0 0.0
        %239 = vmatprep.subr.mxu0 0.0
        %240 = vmatpush1.msra.mxu0 0.0
        %241 = vmatprep.subr.mxu0 0.0
        %242 = vmatpush1.msra.mxu0 0.0
        %243 = vmatprep.subr.mxu0 0.0
        %244 = vmatpush1.msra.mxu0 0.0
        %245 = vmatprep.subr.mxu0 0.0
        %246 = vmatpush1.msra.mxu0 0.0
        %247 = vmatprep.subr.mxu0 0.0
        %248 = vmatpush1.msra.mxu0 0.0
        %249 = vmatprep.subr.mxu0 0.0
        %250 = vmatpush1.msra.mxu0 0.0
        %251 = vmatprep.subr.mxu0 0.0
        %252 = vmatpush1.msra.mxu0 0.0
        %253 = vmatprep.subr.mxu0 0.0
        %254 = vmatpush1.msra.mxu0 0.0
        %255 = vmatprep.subr.mxu0 0.0
        %256 = vmatpush1.msra.mxu0 0.0
        %257 = vmatprep.subr.mxu0 0.0
        %258 = vmatpush1.msra.mxu0 0.0
        %259 = vmatprep.subr.mxu0 0.0
        %260 = vmatpush1.msra.mxu0 0.0
        %261 = vmatprep.subr.mxu0 0.0
        %262 = vmatpush1.msra.mxu0 0.0
        %263 = vmatprep.subr.mxu0 0.0
        %264 = vmatpush1.msra.mxu0 0.0
        %265 = vmatprep.subr.mxu0 0.0
        %266 = vmatpush1.msra.mxu0 0.0
        %267 = vmatprep.subr.mxu0 0.0
        %268 = vmatpush1.msra.mxu0 0.0
        %269 = vmatprep.subr.mxu0 0.0
        %270 = vmatpush1.msra.mxu0 0.0
        %271 = vmatprep.subr.mxu0 0.0
        %272 = vmatpush1.msra.mxu0 0.0
        %273 = vmatprep.subr.mxu0 0.0
        %274 = vmatpush1.msra.mxu0 0.0
        %275 = vmatprep.subr.mxu0 0.0
        %276 = vmatpush1.msra.mxu0 0.0
        %277 = vmatprep.subr.mxu0 0.0
        %278 = vmatpush1.msra.mxu0 0.0
        %279 = vmatprep.subr.mxu0 0.0
        %280 = vmatpush1.msra.mxu0 0.0
        %281 = vmatprep.subr.mxu0 0.0
        %282 = vmatpush1.msra.mxu0 0.0
        %283 = vmatprep.subr.mxu0 0.0
        %284 = vmatpush1.msra.mxu0 0.0
        %285 = vmatprep.subr.mxu0 0.0
        %286 = vmatpush1.msra.mxu0 0.0
        %287 = vmatprep.subr.mxu0 0.0
        %288 = vmatpush1.msra.mxu0 0.0
        %289 = vmatprep.subr.mxu0 0.0
        %290 = vmatpush1.msra.mxu0 0.0
        %291 = vmatprep.subr.mxu0 0.0
        %292 = vmatpush1.msra.mxu0 0.0
        %293 = vmatprep.mubr.f32.mxu0 0.0
        %v294 = vand.u32 %v219, 4294901760
        %v295 = vsub.f32 %v219, %v294
        %v296 = vand.u32 %v295, 4294901760
        %v297 = vsub.f32 %v295, %v296
        %v298 = vand.u32 %v297, 4294901760
        %299 = vmatmul.mubr.f32.gmra.mrb[0].mxu0 %v298
        %v300 = vpop.f32.mrb[0].mxu0
        %v301 = vadd.f32 0.0, %v300
        %v302 = vpop.f32.mrb[0].mxu0
        %303 = vmatprep.mubr.f32.mxu0 0.0
        %v304 = vand.u32 %v222, 4294901760
        %v305 = vsub.f32 %v222, %v304
        %v306 = vand.u32 %v305, 4294901760
        %v307 = vsub.f32 %v305, %v306
        %v308 = vand.u32 %v307, 4294901760
        %309 = vmatmul.mubr.f32.gmra.mrb[0].mxu0 %v308
        %v310 = vpop.f32.mrb[0].mxu0
        %v311 = vadd.f32 0.0, %v310
        %v312 = vpop.f32.mrb[0].mxu0
        %313 = vmatprep.mubr.f32.mxu0 0.0
        %v314 = vand.u32 %v225, 4294901760
        %v315 = vsub.f32 %v225, %v314
        %v316 = vand.u32 %v315, 4294901760
        %v317 = vsub.f32 %v315, %v316
        %v318 = vand.u32 %v317, 4294901760
        %319 = vmatmul.mubr.f32.gmra.mrb[0].mxu0 %v318
        %v320 = vpop.f32.mrb[0].mxu0
        %v321 = vadd.f32 0.0, %v320
        %v322 = vpop.f32.mrb[0].mxu0
        %323 = vdwg.mxu0
        %324 = vmatprep.subr.mxu0 0.0
        %v325 = vand.u32 %v212, 4294901760
        %v326 = vsub.f32 %v212, %v325
        %v327 = vand.u32 %v326, 4294901760
        %v328 = vsub.f32 %v326, %v327
        %v329 = vand.u32 %v328, 4294901760
        %330 = vmatpush1.msra.mxu0 %v329
        %331 = vmatprep.subr.mxu0 0.0
        %v332 = vand.u32 %v213, 4294901760
        %v333 = vsub.f32 %v213, %v332
        %v334 = vand.u32 %v333, 4294901760
        %v335 = vsub.f32 %v333, %v334
        %v336 = vand.u32 %v335, 4294901760
        %337 = vmatpush1.msra.mxu0 %v336
        %338 = vmatprep.subr.mxu0 0.0
        %339 = vmatpush1.msra.mxu0 0.0
        %340 = vmatprep.subr.mxu0 0.0
        %341 = vmatpush1.msra.mxu0 0.0
        %342 = vmatprep.subr.mxu0 0.0
        %343 = vmatpush1.msra.mxu0 0.0
        %344 = vmatprep.subr.mxu0 0.0
        %345 = vmatpush1.msra.mxu0 0.0
        %346 = vmatprep.subr.mxu0 0.0
        %347 = vmatpush1.msra.mxu0 0.0
        %348 = vmatprep.subr.mxu0 0.0
        %349 = vmatpush1.msra.mxu0 0.0
        %350 = vmatprep.subr.mxu0 0.0
        %351 = vmatpush1.msra.mxu0 0.0
        %352 = vmatprep.subr.mxu0 0.0
        %353 = vmatpush1.msra.mxu0 0.0
        %354 = vmatprep.subr.mxu0 0.0
        %355 = vmatpush1.msra.mxu0 0.0
        %356 = vmatprep.subr.mxu0 0.0
        %357 = vmatpush1.msra.mxu0 0.0
        %358 = vmatprep.subr.mxu0 0.0
        %359 = vmatpush1.msra.mxu0 0.0
        %360 = vmatprep.subr.mxu0 0.0
        %361 = vmatpush1.msra.mxu0 0.0
        %362 = vmatprep.subr.mxu0 0.0
        %363 = vmatpush1.msra.mxu0 0.0
        %364 = vmatprep.subr.mxu0 0.0
        %365 = vmatpush1.msra.mxu0 0.0
        %366 = vmatprep.subr.mxu0 0.0
        %367 = vmatpush1.msra.mxu0 0.0
        %368 = vmatprep.subr.mxu0 0.0
        %369 = vmatpush1.msra.mxu0 0.0
        %370 = vmatprep.subr.mxu0 0.0
        %371 = vmatpush1.msra.mxu0 0.0
        %372 = vmatprep.subr.mxu0 0.0
        %373 = vmatpush1.msra.mxu0 0.0
        %374 = vmatprep.subr.mxu0 0.0
        %375 = vmatpush1.msra.mxu0 0.0
        %376 = vmatprep.subr.mxu0 0.0
        %377 = vmatpush1.msra.mxu0 0.0
        %378 = vmatprep.subr.mxu0 0.0
        %379 = vmatpush1.msra.mxu0 0.0
        %380 = vmatprep.subr.mxu0 0.0
        %381 = vmatpush1.msra.mxu0 0.0
        %382 = vmatprep.subr.mxu0 0.0
        %383 = vmatpush1.msra.mxu0 0.0
        %384 = vmatprep.subr.mxu0 0.0
        %385 = vmatpush1.msra.mxu0 0.0
        %386 = vmatprep.subr.mxu0 0.0
        %387 = vmatpush1.msra.mxu0 0.0
        %388 = vmatprep.subr.mxu0 0.0
        %389 = vmatpush1.msra.mxu0 0.0
        %390 = vmatprep.subr.mxu0 0.0
        %391 = vmatpush1.msra.mxu0 0.0
        %392 = vmatprep.subr.mxu0 0.0
        %393 = vmatpush1.msra.mxu0 0.0
        %394 = vmatprep.subr.mxu0 0.0
        %395 = vmatpush1.msra.mxu0 0.0
        %396 = vmatprep.subr.mxu0 0.0
        %397 = vmatpush1.msra.mxu0 0.0
        %398 = vmatprep.mubr.f32.mxu0 0.0
        %v399 = vand.u32 %v219, 4294901760
        %400 = vmatmul.mubr.f32.gmra.mrb[0].mxu0 %v399
        %v401 = vpop.f32.mrb[0].mxu0
        %v402 = vadd.f32 %v301, %v401
        %v403 = vpop.f32.mrb[0].mxu0
        %404 = vmatprep.mubr.f32.mxu0 0.0
        %v405 = vand.u32 %v222, 4294901760
        %406 = vmatmul.mubr.f32.gmra.mrb[0].mxu0 %v405
        %v407 = vpop.f32.mrb[0].mxu0
        %v408 = vadd.f32 %v311, %v407
        %v409 = vpop.f32.mrb[0].mxu0
        %410 = vmatprep.mubr.f32.mxu0 0.0
        %v411 = vand.u32 %v225, 4294901760
        %412 = vmatmul.mubr.f32.gmra.mrb[0].mxu0 %v411
        %v413 = vpop.f32.mrb[0].mxu0
        %v414 = vadd.f32 %v321, %v413
        %v415 = vpop.f32.mrb[0].mxu0
        %416 = vdwg.mxu0
        %417 = vmatprep.subr.mxu0 0.0
        %v418 = vand.u32 %v212, 4294901760
        %v419 = vsub.f32 %v212, %v418
        %420 = vmatpush1.msra.mxu0 %v419
        %421 = vmatprep.subr.mxu0 0.0
        %v422 = vand.u32 %v213, 4294901760
        %v423 = vsub.f32 %v213, %v422
        %424 = vmatpush1.msra.mxu0 %v423
        %425 = vmatprep.subr.mxu0 0.0
        %426 = vmatpush1.msra.mxu0 0.0
        %427 = vmatprep.subr.mxu0 0.0
        %428 = vmatpush1.msra.mxu0 0.0
        %429 = vmatprep.subr.mxu0 0.0
        %430 = vmatpush1.msra.mxu0 0.0
        %431 = vmatprep.subr.mxu0 0.0
        %432 = vmatpush1.msra.mxu0 0.0
        %433 = vmatprep.subr.mxu0 0.0
        %434 = vmatpush1.msra.mxu0 0.0
        %435 = vmatprep.subr.mxu0 0.0
        %436 = vmatpush1.msra.mxu0 0.0
        %437 = vmatprep.subr.mxu0 0.0
        %438 = vmatpush1.msra.mxu0 0.0
        %439 = vmatprep.subr.mxu0 0.0
        %440 = vmatpush1.msra.mxu0 0.0
        %441 = vmatprep.subr.mxu0 0.0
        %442 = vmatpush1.msra.mxu0 0.0
        %443 = vmatprep.subr.mxu0 0.0
        %444 = vmatpush1.msra.mxu0 0.0
        %445 = vmatprep.subr.mxu0 0.0
        %446 = vmatpush1.msra.mxu0 0.0
        %447 = vmatprep.subr.mxu0 0.0
        %448 = vmatpush1.msra.mxu0 0.0
        %449 = vmatprep.subr.mxu0 0.0
        %450 = vmatpush1.msra.mxu0 0.0
        %451 = vmatprep.subr.mxu0 0.0
        %452 = vmatpush1.msra.mxu0 0.0
        %453 = vmatprep.subr.mxu0 0.0
        %454 = vmatpush1.msra.mxu0 0.0
        %455 = vmatprep.subr.mxu0 0.0
        %456 = vmatpush1.msra.mxu0 0.0
        %457 = vmatprep.subr.mxu0 0.0
        %458 = vmatpush1.msra.mxu0 0.0
        %459 = vmatprep.subr.mxu0 0.0
        %460 = vmatpush1.msra.mxu0 0.0
        %461 = vmatprep.subr.mxu0 0.0
        %462 = vmatpush1.msra.mxu0 0.0
        %463 = vmatprep.subr.mxu0 0.0
        %464 = vmatpush1.msra.mxu0 0.0
        %465 = vmatprep.subr.mxu0 0.0
        %466 = vmatpush1.msra.mxu0 0.0
        %467 = vmatprep.subr.mxu0 0.0
        %468 = vmatpush1.msra.mxu0 0.0
        %469 = vmatprep.subr.mxu0 0.0
        %470 = vmatpush1.msra.mxu0 0.0
        %471 = vmatprep.subr.mxu0 0.0
        %472 = vmatpush1.msra.mxu0 0.0
        %473 = vmatprep.subr.mxu0 0.0
        %474 = vmatpush1.msra.mxu0 0.0
        %475 = vmatprep.subr.mxu0 0.0
        %476 = vmatpush1.msra.mxu0 0.0
        %477 = vmatprep.subr.mxu0 0.0
        %478 = vmatpush1.msra.mxu0 0.0
        %479 = vmatprep.subr.mxu0 0.0
        %480 = vmatpush1.msra.mxu0 0.0
        %481 = vmatprep.subr.mxu0 0.0
        %482 = vmatpush1.msra.mxu0 0.0
        %483 = vmatprep.subr.mxu0 0.0
        %484 = vmatpush1.msra.mxu0 0.0
        %485 = vmatprep.mubr.f32.mxu0 0.0
        %v486 = vand.u32 %v219, 4294901760
        %v487 = vsub.f32 %v219, %v486
        %488 = vmatmul.mubr.f32.gmra.mrb[0].mxu0 %v487
        %v489 = vpop.f32.mrb[0].mxu0
        %v490 = vadd.f32 %v402, %v489
        %v491 = vpop.f32.mrb[0].mxu0
        %492 = vmatprep.mubr.f32.mxu0 0.0
        %v493 = vand.u32 %v222, 4294901760
        %v494 = vsub.f32 %v222, %v493
        %495 = vmatmul.mubr.f32.gmra.mrb[0].mxu0 %v494
        %v496 = vpop.f32.mrb[0].mxu0
        %v497 = vadd.f32 %v408, %v496
        %v498 = vpop.f32.mrb[0].mxu0
        %499 = vmatprep.mubr.f32.mxu0 0.0
        %v500 = vand.u32 %v225, 4294901760
        %v501 = vsub.f32 %v225, %v500
        %502 = vmatmul.mubr.f32.gmra.mrb[0].mxu0 %v501
        %v503 = vpop.f32.mrb[0].mxu0
        %v504 = vadd.f32 %v414, %v503
        %v505 = vpop.f32.mrb[0].mxu0
        %506 = vdwg.mxu0
        %507 = vmatprep.subr.mxu0 0.0
        %v508 = vand.u32 %v212, 4294901760
        %509 = vmatpush1.msra.mxu0 %v508
        %510 = vmatprep.subr.mxu0 0.0
        %v511 = vand.u32 %v213, 4294901760
        %512 = vmatpush1.msra.mxu0 %v511
        %513 = vmatprep.subr.mxu0 0.0
        %514 = vmatpush1.msra.mxu0 0.0
        %515 = vmatprep.subr.mxu0 0.0
        %516 = vmatpush1.msra.mxu0 0.0
        %517 = vmatprep.subr.mxu0 0.0
        %518 = vmatpush1.msra.mxu0 0.0
        %519 = vmatprep.subr.mxu0 0.0
        %520 = vmatpush1.msra.mxu0 0.0
        %521 = vmatprep.subr.mxu0 0.0
        %522 = vmatpush1.msra.mxu0 0.0
        %523 = vmatprep.subr.mxu0 0.0
        %524 = vmatpush1.msra.mxu0 0.0
        %525 = vmatprep.subr.mxu0 0.0
        %526 = vmatpush1.msra.mxu0 0.0
        %527 = vmatprep.subr.mxu0 0.0
        %528 = vmatpush1.msra.mxu0 0.0
        %529 = vmatprep.subr.mxu0 0.0
        %530 = vmatpush1.msra.mxu0 0.0
        %531 = vmatprep.subr.mxu0 0.0
        %532 = vmatpush1.msra.mxu0 0.0
        %533 = vmatprep.subr.mxu0 0.0
        %534 = vmatpush1.msra.mxu0 0.0
        %535 = vmatprep.subr.mxu0 0.0
        %536 = vmatpush1.msra.mxu0 0.0
        %537 = vmatprep.subr.mxu0 0.0
        %538 = vmatpush1.msra.mxu0 0.0
        %539 = vmatprep.subr.mxu0 0.0
        %540 = vmatpush1.msra.mxu0 0.0
        %541 = vmatprep.subr.mxu0 0.0
        %542 = vmatpush1.msra.mxu0 0.0
        %543 = vmatprep.subr.mxu0 0.0
        %544 = vmatpush1.msra.mxu0 0.0
        %545 = vmatprep.subr.mxu0 0.0
        %546 = vmatpush1.msra.mxu0 0.0
        %547 = vmatprep.subr.mxu0 0.0
        %548 = vmatpush1.msra.mxu0 0.0
        %549 = vmatprep.subr.mxu0 0.0
        %550 = vmatpush1.msra.mxu0 0.0
        %551 = vmatprep.subr.mxu0 0.0
        %552 = vmatpush1.msra.mxu0 0.0
        %553 = vmatprep.subr.mxu0 0.0
        %554 = vmatpush1.msra.mxu0 0.0
        %555 = vmatprep.subr.mxu0 0.0
        %556 = vmatpush1.msra.mxu0 0.0
        %557 = vmatprep.subr.mxu0 0.0
        %558 = vmatpush1.msra.mxu0 0.0
        %559 = vmatprep.subr.mxu0 0.0
        %560 = vmatpush1.msra.mxu0 0.0
        %561 = vmatprep.subr.mxu0 0.0
        %562 = vmatpush1.msra.mxu0 0.0
        %563 = vmatprep.subr.mxu0 0.0
        %564 = vmatpush1.msra.mxu0 0.0
        %565 = vmatprep.subr.mxu0 0.0
        %566 = vmatpush1.msra.mxu0 0.0
        %567 = vmatprep.subr.mxu0 0.0
        %568 = vmatpush1.msra.mxu0 0.0
        %569 = vmatprep.subr.mxu0 0.0
        %570 = vmatpush1.msra.mxu0 0.0
        %571 = vmatprep.subr.mxu0 0.0
        %572 = vmatpush1.msra.mxu0 0.0
        %573 = vmatprep.mubr.f32.mxu0 0.0
        %v574 = vand.u32 %v219, 4294901760
        %v575 = vsub.f32 %v219, %v574
        %v576 = vand.u32 %v575, 4294901760
        %577 = vmatmul.mubr.f32.gmra.mrb[0].mxu0 %v576
        %v578 = vpop.f32.mrb[0].mxu0
        %v579 = vadd.f32 %v490, %v578
        %v580 = vpop.f32.mrb[0].mxu0
        %581 = vmatprep.mubr.f32.mxu0 0.0
        %v582 = vand.u32 %v222, 4294901760
        %v583 = vsub.f32 %v222, %v582
        %v584 = vand.u32 %v583, 4294901760
        %585 = vmatmul.mubr.f32.gmra.mrb[0].mxu0 %v584
        %v586 = vpop.f32.mrb[0].mxu0
        %v587 = vadd.f32 %v497, %v586
        %v588 = vpop.f32.mrb[0].mxu0
        %589 = vmatprep.mubr.f32.mxu0 0.0
        %v590 = vand.u32 %v225, 4294901760
        %v591 = vsub.f32 %v225, %v590
        %v592 = vand.u32 %v591, 4294901760
        %593 = vmatmul.mubr.f32.gmra.mrb[0].mxu0 %v592
        %v594 = vpop.f32.mrb[0].mxu0
        %v595 = vadd.f32 %v504, %v594
        %v596 = vpop.f32.mrb[0].mxu0
        %597 = vdwg.mxu0
        %598 = vmatprep.subr.mxu0 0.0
        %v599 = vand.u32 %v212, 4294901760
        %v600 = vsub.f32 %v212, %v599
        %v601 = vand.u32 %v600, 4294901760
        %602 = vmatpush1.msra.mxu0 %v601
        %603 = vmatprep.subr.mxu0 0.0
        %v604 = vand.u32 %v213, 4294901760
        %v605 = vsub.f32 %v213, %v604
        %v606 = vand.u32 %v605, 4294901760
        %607 = vmatpush1.msra.mxu0 %v606
        %608 = vmatprep.subr.mxu0 0.0
        %609 = vmatpush1.msra.mxu0 0.0
        %610 = vmatprep.subr.mxu0 0.0
        %611 = vmatpush1.msra.mxu0 0.0
        %612 = vmatprep.subr.mxu0 0.0
        %613 = vmatpush1.msra.mxu0 0.0
        %614 = vmatprep.subr.mxu0 0.0
        %615 = vmatpush1.msra.mxu0 0.0
        %616 = vmatprep.subr.mxu0 0.0
        %617 = vmatpush1.msra.mxu0 0.0
        %618 = vmatprep.subr.mxu0 0.0
        %619 = vmatpush1.msra.mxu0 0.0
        %620 = vmatprep.subr.mxu0 0.0
        %621 = vmatpush1.msra.mxu0 0.0
        %622 = vmatprep.subr.mxu0 0.0
        %623 = vmatpush1.msra.mxu0 0.0
        %624 = vmatprep.subr.mxu0 0.0
        %625 = vmatpush1.msra.mxu0 0.0
        %626 = vmatprep.subr.mxu0 0.0
        %627 = vmatpush1.msra.mxu0 0.0
        %628 = vmatprep.subr.mxu0 0.0
        %629 = vmatpush1.msra.mxu0 0.0
        %630 = vmatprep.subr.mxu0 0.0
        %631 = vmatpush1.msra.mxu0 0.0
        %632 = vmatprep.subr.mxu0 0.0
        %633 = vmatpush1.msra.mxu0 0.0
        %634 = vmatprep.subr.mxu0 0.0
        %635 = vmatpush1.msra.mxu0 0.0
        %636 = vmatprep.subr.mxu0 0.0
        %637 = vmatpush1.msra.mxu0 0.0
        %638 = vmatprep.subr.mxu0 0.0
        %639 = vmatpush1.msra.mxu0 0.0
        %640 = vmatprep.subr.mxu0 0.0
        %641 = vmatpush1.msra.mxu0 0.0
        %642 = vmatprep.subr.mxu0 0.0
        %643 = vmatpush1.msra.mxu0 0.0
        %644 = vmatprep.subr.mxu0 0.0
        %645 = vmatpush1.msra.mxu0 0.0
        %646 = vmatprep.subr.mxu0 0.0
        %647 = vmatpush1.msra.mxu0 0.0
        %648 = vmatprep.subr.mxu0 0.0
        %649 = vmatpush1.msra.mxu0 0.0
        %650 = vmatprep.subr.mxu0 0.0
        %651 = vmatpush1.msra.mxu0 0.0
        %652 = vmatprep.subr.mxu0 0.0
        %653 = vmatpush1.msra.mxu0 0.0
        %654 = vmatprep.subr.mxu0 0.0
        %655 = vmatpush1.msra.mxu0 0.0
        %656 = vmatprep.subr.mxu0 0.0
        %657 = vmatpush1.msra.mxu0 0.0
        %658 = vmatprep.subr.mxu0 0.0
        %659 = vmatpush1.msra.mxu0 0.0
        %660 = vmatprep.subr.mxu0 0.0
        %661 = vmatpush1.msra.mxu0 0.0
        %662 = vmatprep.subr.mxu0 0.0
        %663 = vmatpush1.msra.mxu0 0.0
        %664 = vmatprep.subr.mxu0 0.0
        %665 = vmatpush1.msra.mxu0 0.0
        %666 = vmatprep.subr.mxu0 0.0
        %667 = vmatpush1.msra.mxu0 0.0
        %668 = vmatprep.mubr.f32.mxu0 0.0
        %v669 = vand.u32 %v219, 4294901760
        %670 = vmatmul.mubr.f32.gmra.mrb[0].mxu0 %v669
        %v671 = vpop.f32.mrb[0].mxu0
        %v672 = vadd.f32 %v579, %v671
        %v673 = vpop.f32.mrb[0].mxu0
        %674 = vmatprep.mubr.f32.mxu0 0.0
        %v675 = vand.u32 %v222, 4294901760
        %676 = vmatmul.mubr.f32.gmra.mrb[0].mxu0 %v675
        %v677 = vpop.f32.mrb[0].mxu0
        %v678 = vadd.f32 %v587, %v677
        %v679 = vpop.f32.mrb[0].mxu0
        %680 = vmatprep.mubr.f32.mxu0 0.0
        %v681 = vand.u32 %v225, 4294901760
        %682 = vmatmul.mubr.f32.gmra.mrb[0].mxu0 %v681
        %v683 = vpop.f32.mrb[0].mxu0
        %v684 = vadd.f32 %v595, %v683
        %v685 = vpop.f32.mrb[0].mxu0
        %686 = vdwg.mxu0
        %687 = vmatprep.subr.mxu0 0.0
        %v688 = vand.u32 %v212, 4294901760
        %689 = vmatpush1.msra.mxu0 %v688
        %690 = vmatprep.subr.mxu0 0.0
        %v691 = vand.u32 %v213, 4294901760
        %692 = vmatpush1.msra.mxu0 %v691
        %693 = vmatprep.subr.mxu0 0.0
        %694 = vmatpush1.msra.mxu0 0.0
        %695 = vmatprep.subr.mxu0 0.0
        %696 = vmatpush1.msra.mxu0 0.0
        %697 = vmatprep.subr.mxu0 0.0
        %698 = vmatpush1.msra.mxu0 0.0
        %699 = vmatprep.subr.mxu0 0.0
        %700 = vmatpush1.msra.mxu0 0.0
        %701 = vmatprep.subr.mxu0 0.0
        %702 = vmatpush1.msra.mxu0 0.0
        %703 = vmatprep.subr.mxu0 0.0
        %704 = vmatpush1.msra.mxu0 0.0
        %705 = vmatprep.subr.mxu0 0.0
        %706 = vmatpush1.msra.mxu0 0.0
        %707 = vmatprep.subr.mxu0 0.0
        %708 = vmatpush1.msra.mxu0 0.0
        %709 = vmatprep.subr.mxu0 0.0
        %710 = vmatpush1.msra.mxu0 0.0
        %711 = vmatprep.subr.mxu0 0.0
        %712 = vmatpush1.msra.mxu0 0.0
        %713 = vmatprep.subr.mxu0 0.0
        %714 = vmatpush1.msra.mxu0 0.0
        %715 = vmatprep.subr.mxu0 0.0
        %716 = vmatpush1.msra.mxu0 0.0
        %717 = vmatprep.subr.mxu0 0.0
        %718 = vmatpush1.msra.mxu0 0.0
        %719 = vmatprep.subr.mxu0 0.0
        %720 = vmatpush1.msra.mxu0 0.0
        %721 = vmatprep.subr.mxu0 0.0
        %722 = vmatpush1.msra.mxu0 0.0
        %723 = vmatprep.subr.mxu0 0.0
        %724 = vmatpush1.msra.mxu0 0.0
        %725 = vmatprep.subr.mxu0 0.0
        %726 = vmatpush1.msra.mxu0 0.0
        %727 = vmatprep.subr.mxu0 0.0
        %728 = vmatpush1.msra.mxu0 0.0
        %729 = vmatprep.subr.mxu0 0.0
        %730 = vmatpush1.msra.mxu0 0.0
        %731 = vmatprep.subr.mxu0 0.0
        %732 = vmatpush1.msra.mxu0 0.0
        %733 = vmatprep.subr.mxu0 0.0
        %734 = vmatpush1.msra.mxu0 0.0
        %735 = vmatprep.subr.mxu0 0.0
        %736 = vmatpush1.msra.mxu0 0.0
        %737 = vmatprep.subr.mxu0 0.0
        %738 = vmatpush1.msra.mxu0 0.0
        %739 = vmatprep.subr.mxu0 0.0
        %740 = vmatpush1.msra.mxu0 0.0
        %741 = vmatprep.subr.mxu0 0.0
        %742 = vmatpush1.msra.mxu0 0.0
        %743 = vmatprep.subr.mxu0 0.0
        %744 = vmatpush1.msra.mxu0 0.0
        %745 = vmatprep.subr.mxu0 0.0
        %746 = vmatpush1.msra.mxu0 0.0
        %747 = vmatprep.subr.mxu0 0.0
        %748 = vmatpush1.msra.mxu0 0.0
        %749 = vmatprep.subr.mxu0 0.0
        %750 = vmatpush1.msra.mxu0 0.0
        %751 = vmatprep.subr.mxu0 0.0
        %752 = vmatpush1.msra.mxu0 0.0
        %753 = vmatprep.mubr.f32.mxu0 0.0
        %v754 = vand.u32 %v219, 4294901760
        %755 = vmatmul.mubr.f32.gmra.mrb[0].mxu0 %v754
        %v756 = vpop.f32.mrb[0].mxu0
        %v757 = vadd.f32 %v672, %v756
        %v758 = vpop.f32.mrb[0].mxu0
        %759 = vmatprep.mubr.f32.mxu0 0.0
        %v760 = vand.u32 %v222, 4294901760
        %761 = vmatmul.mubr.f32.gmra.mrb[0].mxu0 %v760
        %v762 = vpop.f32.mrb[0].mxu0
        %v763 = vadd.f32 %v678, %v762
        %v764 = vpop.f32.mrb[0].mxu0
        %765 = vmatprep.mubr.f32.mxu0 0.0
        %v766 = vand.u32 %v225, 4294901760
        %767 = vmatmul.mubr.f32.gmra.mrb[0].mxu0 %v766
        %v768 = vpop.f32.mrb[0].mxu0
        %v769 = vadd.f32 %v684, %v768
        %v770 = vpop.f32.mrb[0].mxu0
        %771 = vdwg.mxu0
        %v772 = vld [vmem:[%s2] sm:$0xff]
        %v773 = vld [vmem:[%s2 + $0x8] sm:$0xf]
        %vm774 = vcmask 97280
        %v776 = vsel %vm774, %v757, 0
        %v779 = vsel %vm774, %v763, 0
        %v782 = vsel %vm774, %v769, 0
        %vm784 = vcmask 1043456
        %v786 = vsel %vm784, %v773, 0
        %788 = vmatprep.subr.mxu0 0.0
        %v789 = vand.u32 %v772, 4294901760
        %790 = vmatpush1.msra.mxu0 %v789
        %791 = vmatprep.subr.mxu0 0.0
        %v792 = vand.u32 %v786, 4294901760
        %793 = vmatpush1.msra.mxu0 %v792
        %794 = vmatprep.subr.mxu0 0.0
        %795 = vmatpush1.msra.mxu0 0.0
        %796 = vmatprep.subr.mxu0 0.0
        %797 = vmatpush1.msra.mxu0 0.0
        %798 = vmatprep.subr.mxu0 0.0
        %799 = vmatpush1.msra.mxu0 0.0
        %800 = vmatprep.subr.mxu0 0.0
        %801 = vmatpush1.msra.mxu0 0.0
        %802 = vmatprep.subr.mxu0 0.0
        %803 = vmatpush1.msra.mxu0 0.0
        %804 = vmatprep.subr.mxu0 0.0
        %805 = vmatpush1.msra.mxu0 0.0
        %806 = vmatprep.subr.mxu0 0.0
        %807 = vmatpush1.msra.mxu0 0.0
        %808 = vmatprep.subr.mxu0 0.0
        %809 = vmatpush1.msra.mxu0 0.0
        %810 = vmatprep.subr.mxu0 0.0
        %811 = vmatpush1.msra.mxu0 0.0
        %812 = vmatprep.subr.mxu0 0.0
        %813 = vmatpush1.msra.mxu0 0.0
        %814 = vmatprep.subr.mxu0 0.0
        %815 = vmatpush1.msra.mxu0 0.0
        %816 = vmatprep.subr.mxu0 0.0
        %817 = vmatpush1.msra.mxu0 0.0
        %818 = vmatprep.subr.mxu0 0.0
        %819 = vmatpush1.msra.mxu0 0.0
        %820 = vmatprep.subr.mxu0 0.0
        %821 = vmatpush1.msra.mxu0 0.0
        %822 = vmatprep.subr.mxu0 0.0
        %823 = vmatpush1.msra.mxu0 0.0
        %824 = vmatprep.subr.mxu0 0.0
        %825 = vmatpush1.msra.mxu0 0.0
        %826 = vmatprep.subr.mxu0 0.0
        %827 = vmatpush1.msra.mxu0 0.0
        %828 = vmatprep.subr.mxu0 0.0
        %829 = vmatpush1.msra.mxu0 0.0
        %830 = vmatprep.subr.mxu0 0.0
        %831 = vmatpush1.msra.mxu0 0.0
        %832 = vmatprep.subr.mxu0 0.0
        %833 = vmatpush1.msra.mxu0 0.0
        %834 = vmatprep.subr.mxu0 0.0
        %835 = vmatpush1.msra.mxu0 0.0
        %836 = vmatprep.subr.mxu0 0.0
        %837 = vmatpush1.msra.mxu0 0.0
        %838 = vmatprep.subr.mxu0 0.0
        %839 = vmatpush1.msra.mxu0 0.0
        %840 = vmatprep.subr.mxu0 0.0
        %841 = vmatpush1.msra.mxu0 0.0
        %842 = vmatprep.subr.mxu0 0.0
        %843 = vmatpush1.msra.mxu0 0.0
        %844 = vmatprep.subr.mxu0 0.0
        %845 = vmatpush1.msra.mxu0 0.0
        %846 = vmatprep.subr.mxu0 0.0
        %847 = vmatpush1.msra.mxu0 0.0
        %848 = vmatprep.subr.mxu0 0.0
        %849 = vmatpush1.msra.mxu0 0.0
        %850 = vmatprep.subr.mxu0 0.0
        %851 = vmatpush1.msra.mxu0 0.0
        %852 = vmatprep.subr.mxu0 0.0
        %853 = vmatpush1.msra.mxu0 0.0
        %854 = vmatprep.mubr.f32.mxu0 0.0
        %v855 = vand.u32 %v776, 4294901760
        %v856 = vsub.f32 %v776, %v855
        %v857 = vand.u32 %v856, 4294901760
        %v858 = vsub.f32 %v856, %v857
        %v859 = vand.u32 %v858, 4294901760
        %860 = vmatmul.mubr.f32.gmra.mrb[0].mxu0 %v859
        %v861 = vpop.f32.mrb[0].mxu0
        %v862 = vadd.f32 0.5, %v861
        %v863 = vpop.f32.mrb[0].mxu0
        %864 = vmatprep.mubr.f32.mxu0 0.0
        %v865 = vand.u32 %v779, 4294901760
        %v866 = vsub.f32 %v779, %v865
        %v867 = vand.u32 %v866, 4294901760
        %v868 = vsub.f32 %v866, %v867
        %v869 = vand.u32 %v868, 4294901760
        %870 = vmatmul.mubr.f32.gmra.mrb[0].mxu0 %v869
        %v871 = vpop.f32.mrb[0].mxu0
        %v872 = vadd.f32 0.5, %v871
        %v873 = vpop.f32.mrb[0].mxu0
        %874 = vmatprep.mubr.f32.mxu0 0.0
        %v875 = vand.u32 %v782, 4294901760
        %v876 = vsub.f32 %v782, %v875
        %v877 = vand.u32 %v876, 4294901760
        %v878 = vsub.f32 %v876, %v877
        %v879 = vand.u32 %v878, 4294901760
        %880 = vmatmul.mubr.f32.gmra.mrb[0].mxu0 %v879
        %v881 = vpop.f32.mrb[0].mxu0
        %v882 = vadd.f32 0.5, %v881
        %v883 = vpop.f32.mrb[0].mxu0
        %884 = vdwg.mxu0
        %885 = vmatprep.subr.mxu0 0.0
        %v886 = vand.u32 %v772, 4294901760
        %v887 = vsub.f32 %v772, %v886
        %v888 = vand.u32 %v887, 4294901760
        %v889 = vsub.f32 %v887, %v888
        %v890 = vand.u32 %v889, 4294901760
        %891 = vmatpush1.msra.mxu0 %v890
        %892 = vmatprep.subr.mxu0 0.0
        %v893 = vand.u32 %v786, 4294901760
        %v894 = vsub.f32 %v786, %v893
        %v895 = vand.u32 %v894, 4294901760
        %v896 = vsub.f32 %v894, %v895
        %v897 = vand.u32 %v896, 4294901760
        %898 = vmatpush1.msra.mxu0 %v897
        %899 = vmatprep.subr.mxu0 0.0
        %900 = vmatpush1.msra.mxu0 0.0
        %901 = vmatprep.subr.mxu0 0.0
        %902 = vmatpush1.msra.mxu0 0.0
        %903 = vmatprep.subr.mxu0 0.0
        %904 = vmatpush1.msra.mxu0 0.0
        %905 = vmatprep.subr.mxu0 0.0
        %906 = vmatpush1.msra.mxu0 0.0
        %907 = vmatprep.subr.mxu0 0.0
        %908 = vmatpush1.msra.mxu0 0.0
        %909 = vmatprep.subr.mxu0 0.0
        %910 = vmatpush1.msra.mxu0 0.0
        %911 = vmatprep.subr.mxu0 0.0
        %912 = vmatpush1.msra.mxu0 0.0
        %913 = vmatprep.subr.mxu0 0.0
        %914 = vmatpush1.msra.mxu0 0.0
        %915 = vmatprep.subr.mxu0 0.0
        %916 = vmatpush1.msra.mxu0 0.0
        %917 = vmatprep.subr.mxu0 0.0
        %918 = vmatpush1.msra.mxu0 0.0
        %919 = vmatprep.subr.mxu0 0.0
        %920 = vmatpush1.msra.mxu0 0.0
        %921 = vmatprep.subr.mxu0 0.0
        %922 = vmatpush1.msra.mxu0 0.0
        %923 = vmatprep.subr.mxu0 0.0
        %924 = vmatpush1.msra.mxu0 0.0
        %925 = vmatprep.subr.mxu0 0.0
        %926 = vmatpush1.msra.mxu0 0.0
        %927 = vmatprep.subr.mxu0 0.0
        %928 = vmatpush1.msra.mxu0 0.0
        %929 = vmatprep.subr.mxu0 0.0
        %930 = vmatpush1.msra.mxu0 0.0
        %931 = vmatprep.subr.mxu0 0.0
        %932 = vmatpush1.msra.mxu0 0.0
        %933 = vmatprep.subr.mxu0 0.0
        %934 = vmatpush1.msra.mxu0 0.0
        %935 = vmatprep.subr.mxu0 0.0
        %936 = vmatpush1.msra.mxu0 0.0
        %937 = vmatprep.subr.mxu0 0.0
        %938 = vmatpush1.msra.mxu0 0.0
        %939 = vmatprep.subr.mxu0 0.0
        %940 = vmatpush1.msra.mxu0 0.0
        %941 = vmatprep.subr.mxu0 0.0
        %942 = vmatpush1.msra.mxu0 0.0
        %943 = vmatprep.subr.mxu0 0.0
        %944 = vmatpush1.msra.mxu0 0.0
        %945 = vmatprep.subr.mxu0 0.0
        %946 = vmatpush1.msra.mxu0 0.0
        %947 = vmatprep.subr.mxu0 0.0
        %948 = vmatpush1.msra.mxu0 0.0
        %949 = vmatprep.subr.mxu0 0.0
        %950 = vmatpush1.msra.mxu0 0.0
        %951 = vmatprep.subr.mxu0 0.0
        %952 = vmatpush1.msra.mxu0 0.0
        %953 = vmatprep.subr.mxu0 0.0
        %954 = vmatpush1.msra.mxu0 0.0
        %955 = vmatprep.subr.mxu0 0.0
        %956 = vmatpush1.msra.mxu0 0.0
        %957 = vmatprep.subr.mxu0 0.0
        %958 = vmatpush1.msra.mxu0 0.0
        %959 = vmatprep.mubr.f32.mxu0 0.0
        %v960 = vand.u32 %v776, 4294901760
        %961 = vmatmul.mubr.f32.gmra.mrb[0].mxu0 %v960
        %v962 = vpop.f32.mrb[0].mxu0
        %v963 = vadd.f32 %v862, %v962
        %v964 = vpop.f32.mrb[0].mxu0
        %965 = vmatprep.mubr.f32.mxu0 0.0
        %v966 = vand.u32 %v779, 4294901760
        %967 = vmatmul.mubr.f32.gmra.mrb[0].mxu0 %v966
        %v968 = vpop.f32.mrb[0].mxu0
        %v969 = vadd.f32 %v872, %v968
        %v970 = vpop.f32.mrb[0].mxu0
        %971 = vmatprep.mubr.f32.mxu0 0.0
        %v972 = vand.u32 %v782, 4294901760
        %973 = vmatmul.mubr.f32.gmra.mrb[0].mxu0 %v972
        %v974 = vpop.f32.mrb[0].mxu0
        %v975 = vadd.f32 %v882, %v974
        %v976 = vpop.f32.mrb[0].mxu0
        %977 = vdwg.mxu0
        %978 = vmatprep.subr.mxu0 0.0
        %v979 = vand.u32 %v772, 4294901760
        %v980 = vsub.f32 %v772, %v979
        %981 = vmatpush1.msra.mxu0 %v980
        %982 = vmatprep.subr.mxu0 0.0
        %v983 = vand.u32 %v786, 4294901760
        %v984 = vsub.f32 %v786, %v983
        %985 = vmatpush1.msra.mxu0 %v984
        %986 = vmatprep.subr.mxu0 0.0
        %987 = vmatpush1.msra.mxu0 0.0
        %988 = vmatprep.subr.mxu0 0.0
        %989 = vmatpush1.msra.mxu0 0.0
        %990 = vmatprep.subr.mxu0 0.0
        %991 = vmatpush1.msra.mxu0 0.0
        %992 = vmatprep.subr.mxu0 0.0
        %993 = vmatpush1.msra.mxu0 0.0
        %994 = vmatprep.subr.mxu0 0.0
        %995 = vmatpush1.msra.mxu0 0.0
        %996 = vmatprep.subr.mxu0 0.0
        %997 = vmatpush1.msra.mxu0 0.0
        %998 = vmatprep.subr.mxu0 0.0
        %999 = vmatpush1.msra.mxu0 0.0
        %1000 = vmatprep.subr.mxu0 0.0
        %1001 = vmatpush1.msra.mxu0 0.0
        %1002 = vmatprep.subr.mxu0 0.0
        %1003 = vmatpush1.msra.mxu0 0.0
        %1004 = vmatprep.subr.mxu0 0.0
        %1005 = vmatpush1.msra.mxu0 0.0
        %1006 = vmatprep.subr.mxu0 0.0
        %1007 = vmatpush1.msra.mxu0 0.0
        %1008 = vmatprep.subr.mxu0 0.0
        %1009 = vmatpush1.msra.mxu0 0.0
        %1010 = vmatprep.subr.mxu0 0.0
        %1011 = vmatpush1.msra.mxu0 0.0
        %1012 = vmatprep.subr.mxu0 0.0
        %1013 = vmatpush1.msra.mxu0 0.0
        %1014 = vmatprep.subr.mxu0 0.0
        %1015 = vmatpush1.msra.mxu0 0.0
        %1016 = vmatprep.subr.mxu0 0.0
        %1017 = vmatpush1.msra.mxu0 0.0
        %1018 = vmatprep.subr.mxu0 0.0
        %1019 = vmatpush1.msra.mxu0 0.0
        %1020 = vmatprep.subr.mxu0 0.0
        %1021 = vmatpush1.msra.mxu0 0.0
        %1022 = vmatprep.subr.mxu0 0.0
        %1023 = vmatpush1.msra.mxu0 0.0
        %1024 = vmatprep.subr.mxu0 0.0
        %1025 = vmatpush1.msra.mxu0 0.0
        %1026 = vmatprep.subr.mxu0 0.0
        %1027 = vmatpush1.msra.mxu0 0.0
        %1028 = vmatprep.subr.mxu0 0.0
        %1029 = vmatpush1.msra.mxu0 0.0
        %1030 = vmatprep.subr.mxu0 0.0
        %1031 = vmatpush1.msra.mxu0 0.0
        %1032 = vmatprep.subr.mxu0 0.0
        %1033 = vmatpush1.msra.mxu0 0.0
        %1034 = vmatprep.subr.mxu0 0.0
        %1035 = vmatpush1.msra.mxu0 0.0
        %1036 = vmatprep.subr.mxu0 0.0
        %1037 = vmatpush1.msra.mxu0 0.0
        %1038 = vmatprep.subr.mxu0 0.0
        %1039 = vmatpush1.msra.mxu0 0.0
        %1040 = vmatprep.subr.mxu0 0.0
        %1041 = vmatpush1.msra.mxu0 0.0
        %1042 = vmatprep.subr.mxu0 0.0
        %1043 = vmatpush1.msra.mxu0 0.0
        %1044 = vmatprep.subr.mxu0 0.0
        %1045 = vmatpush1.msra.mxu0 0.0
        %1046 = vmatprep.mubr.f32.mxu0 0.0
        %v1047 = vand.u32 %v776, 4294901760
        %v1048 = vsub.f32 %v776, %v1047
        %1049 = vmatmul.mubr.f32.gmra.mrb[0].mxu0 %v1048
        %v1050 = vpop.f32.mrb[0].mxu0
        %v1051 = vadd.f32 %v963, %v1050
        %v1052 = vpop.f32.mrb[0].mxu0
        %1053 = vmatprep.mubr.f32.mxu0 0.0
        %v1054 = vand.u32 %v779, 4294901760
        %v1055 = vsub.f32 %v779, %v1054
        %1056 = vmatmul.mubr.f32.gmra.mrb[0].mxu0 %v1055
        %v1057 = vpop.f32.mrb[0].mxu0
        %v1058 = vadd.f32 %v969, %v1057
        %v1059 = vpop.f32.mrb[0].mxu0
        %1060 = vmatprep.mubr.f32.mxu0 0.0
        %v1061 = vand.u32 %v782, 4294901760
        %v1062 = vsub.f32 %v782, %v1061
        %1063 = vmatmul.mubr.f32.gmra.mrb[0].mxu0 %v1062
        %v1064 = vpop.f32.mrb[0].mxu0
        %v1065 = vadd.f32 %v975, %v1064
        %v1066 = vpop.f32.mrb[0].mxu0
        %1067 = vdwg.mxu0
        %1068 = vmatprep.subr.mxu0 0.0
        %v1069 = vand.u32 %v772, 4294901760
        %1070 = vmatpush1.msra.mxu0 %v1069
        %1071 = vmatprep.subr.mxu0 0.0
        %v1072 = vand.u32 %v786, 4294901760
        %1073 = vmatpush1.msra.mxu0 %v1072
        %1074 = vmatprep.subr.mxu0 0.0
        %1075 = vmatpush1.msra.mxu0 0.0
        %1076 = vmatprep.subr.mxu0 0.0
        %1077 = vmatpush1.msra.mxu0 0.0
        %1078 = vmatprep.subr.mxu0 0.0
        %1079 = vmatpush1.msra.mxu0 0.0
        %1080 = vmatprep.subr.mxu0 0.0
        %1081 = vmatpush1.msra.mxu0 0.0
        %1082 = vmatprep.subr.mxu0 0.0
        %1083 = vmatpush1.msra.mxu0 0.0
        %1084 = vmatprep.subr.mxu0 0.0
        %1085 = vmatpush1.msra.mxu0 0.0
        %1086 = vmatprep.subr.mxu0 0.0
        %1087 = vmatpush1.msra.mxu0 0.0
        %1088 = vmatprep.subr.mxu0 0.0
        %1089 = vmatpush1.msra.mxu0 0.0
        %1090 = vmatprep.subr.mxu0 0.0
        %1091 = vmatpush1.msra.mxu0 0.0
        %1092 = vmatprep.subr.mxu0 0.0
        %1093 = vmatpush1.msra.mxu0 0.0
        %1094 = vmatprep.subr.mxu0 0.0
        %1095 = vmatpush1.msra.mxu0 0.0
        %1096 = vmatprep.subr.mxu0 0.0
        %1097 = vmatpush1.msra.mxu0 0.0
        %1098 = vmatprep.subr.mxu0 0.0
        %1099 = vmatpush1.msra.mxu0 0.0
        %1100 = vmatprep.subr.mxu0 0.0
        %1101 = vmatpush1.msra.mxu0 0.0
        %1102 = vmatprep.subr.mxu0 0.0
        %1103 = vmatpush1.msra.mxu0 0.0
        %1104 = vmatprep.subr.mxu0 0.0
        %1105 = vmatpush1.msra.mxu0 0.0
        %1106 = vmatprep.subr.mxu0 0.0
        %1107 = vmatpush1.msra.mxu0 0.0
        %1108 = vmatprep.subr.mxu0 0.0
        %1109 = vmatpush1.msra.mxu0 0.0
        %1110 = vmatprep.subr.mxu0 0.0
        %1111 = vmatpush1.msra.mxu0 0.0
        %1112 = vmatprep.subr.mxu0 0.0
        %1113 = vmatpush1.msra.mxu0 0.0
        %1114 = vmatprep.subr.mxu0 0.0
        %1115 = vmatpush1.msra.mxu0 0.0
        %1116 = vmatprep.subr.mxu0 0.0
        %1117 = vmatpush1.msra.mxu0 0.0
        %1118 = vmatprep.subr.mxu0 0.0
        %1119 = vmatpush1.msra.mxu0 0.0
        %1120 = vmatprep.subr.mxu0 0.0
        %1121 = vmatpush1.msra.mxu0 0.0
        %1122 = vmatprep.subr.mxu0 0.0
        %1123 = vmatpush1.msra.mxu0 0.0
        %1124 = vmatprep.subr.mxu0 0.0
        %1125 = vmatpush1.msra.mxu0 0.0
        %1126 = vmatprep.subr.mxu0 0.0
        %1127 = vmatpush1.msra.mxu0 0.0
        %1128 = vmatprep.subr.mxu0 0.0
        %1129 = vmatpush1.msra.mxu0 0.0
        %1130 = vmatprep.subr.mxu0 0.0
        %1131 = vmatpush1.msra.mxu0 0.0
        %1132 = vmatprep.subr.mxu0 0.0
        %1133 = vmatpush1.msra.mxu0 0.0
        %1134 = vmatprep.mubr.f32.mxu0 0.0
        %v1135 = vand.u32 %v776, 4294901760
        %v1136 = vsub.f32 %v776, %v1135
        %v1137 = vand.u32 %v1136, 4294901760
        %1138 = vmatmul.mubr.f32.gmra.mrb[0].mxu0 %v1137
        %v1139 = vpop.f32.mrb[0].mxu0
        %v1140 = vadd.f32 %v1051, %v1139
        %v1141 = vpop.f32.mrb[0].mxu0
        %1142 = vmatprep.mubr.f32.mxu0 0.0
        %v1143 = vand.u32 %v779, 4294901760
        %v1144 = vsub.f32 %v779, %v1143
        %v1145 = vand.u32 %v1144, 4294901760
        %1146 = vmatmul.mubr.f32.gmra.mrb[0].mxu0 %v1145
        %v1147 = vpop.f32.mrb[0].mxu0
        %v1148 = vadd.f32 %v1058, %v1147
        %v1149 = vpop.f32.mrb[0].mxu0
        %1150 = vmatprep.mubr.f32.mxu0 0.0
        %v1151 = vand.u32 %v782, 4294901760
        %v1152 = vsub.f32 %v782, %v1151
        %v1153 = vand.u32 %v1152, 4294901760
        %1154 = vmatmul.mubr.f32.gmra.mrb[0].mxu0 %v1153
        %v1155 = vpop.f32.mrb[0].mxu0
        %v1156 = vadd.f32 %v1065, %v1155
        %v1157 = vpop.f32.mrb[0].mxu0
        %1158 = vdwg.mxu0
        %1159 = vmatprep.subr.mxu0 0.0
        %v1160 = vand.u32 %v772, 4294901760
        %v1161 = vsub.f32 %v772, %v1160
        %v1162 = vand.u32 %v1161, 4294901760
        %1163 = vmatpush1.msra.mxu0 %v1162
        %1164 = vmatprep.subr.mxu0 0.0
        %v1165 = vand.u32 %v786, 4294901760
        %v1166 = vsub.f32 %v786, %v1165
        %v1167 = vand.u32 %v1166, 4294901760
        %1168 = vmatpush1.msra.mxu0 %v1167
        %1169 = vmatprep.subr.mxu0 0.0
        %1170 = vmatpush1.msra.mxu0 0.0
        %1171 = vmatprep.subr.mxu0 0.0
        %1172 = vmatpush1.msra.mxu0 0.0
        %1173 = vmatprep.subr.mxu0 0.0
        %1174 = vmatpush1.msra.mxu0 0.0
        %1175 = vmatprep.subr.mxu0 0.0
        %1176 = vmatpush1.msra.mxu0 0.0
        %1177 = vmatprep.subr.mxu0 0.0
        %1178 = vmatpush1.msra.mxu0 0.0
        %1179 = vmatprep.subr.mxu0 0.0
        %1180 = vmatpush1.msra.mxu0 0.0
        %1181 = vmatprep.subr.mxu0 0.0
        %1182 = vmatpush1.msra.mxu0 0.0
        %1183 = vmatprep.subr.mxu0 0.0
        %1184 = vmatpush1.msra.mxu0 0.0
        %1185 = vmatprep.subr.mxu0 0.0
        %1186 = vmatpush1.msra.mxu0 0.0
        %1187 = vmatprep.subr.mxu0 0.0
        %1188 = vmatpush1.msra.mxu0 0.0
        %1189 = vmatprep.subr.mxu0 0.0
        %1190 = vmatpush1.msra.mxu0 0.0
        %1191 = vmatprep.subr.mxu0 0.0
        %1192 = vmatpush1.msra.mxu0 0.0
        %1193 = vmatprep.subr.mxu0 0.0
        %1194 = vmatpush1.msra.mxu0 0.0
        %1195 = vmatprep.subr.mxu0 0.0
        %1196 = vmatpush1.msra.mxu0 0.0
        %1197 = vmatprep.subr.mxu0 0.0
        %1198 = vmatpush1.msra.mxu0 0.0
        %1199 = vmatprep.subr.mxu0 0.0
        %1200 = vmatpush1.msra.mxu0 0.0
        %1201 = vmatprep.subr.mxu0 0.0
        %1202 = vmatpush1.msra.mxu0 0.0
        %1203 = vmatprep.subr.mxu0 0.0
        %1204 = vmatpush1.msra.mxu0 0.0
        %1205 = vmatprep.subr.mxu0 0.0
        %1206 = vmatpush1.msra.mxu0 0.0
        %1207 = vmatprep.subr.mxu0 0.0
        %1208 = vmatpush1.msra.mxu0 0.0
        %1209 = vmatprep.subr.mxu0 0.0
        %1210 = vmatpush1.msra.mxu0 0.0
        %1211 = vmatprep.subr.mxu0 0.0
        %1212 = vmatpush1.msra.mxu0 0.0
        %1213 = vmatprep.subr.mxu0 0.0
        %1214 = vmatpush1.msra.mxu0 0.0
        %1215 = vmatprep.subr.mxu0 0.0
        %1216 = vmatpush1.msra.mxu0 0.0
        %1217 = vmatprep.subr.mxu0 0.0
        %1218 = vmatpush1.msra.mxu0 0.0
        %1219 = vmatprep.subr.mxu0 0.0
        %1220 = vmatpush1.msra.mxu0 0.0
        %1221 = vmatprep.subr.mxu0 0.0
        %1222 = vmatpush1.msra.mxu0 0.0
        %1223 = vmatprep.subr.mxu0 0.0
        %1224 = vmatpush1.msra.mxu0 0.0
        %1225 = vmatprep.subr.mxu0 0.0
        %1226 = vmatpush1.msra.mxu0 0.0
        %1227 = vmatprep.subr.mxu0 0.0
        %1228 = vmatpush1.msra.mxu0 0.0
        %1229 = vmatprep.mubr.f32.mxu0 0.0
        %v1230 = vand.u32 %v776, 4294901760
        %1231 = vmatmul.mubr.f32.gmra.mrb[0].mxu0 %v1230
        %v1232 = vpop.f32.mrb[0].mxu0
        %v1233 = vadd.f32 %v1140, %v1232
        %v1234 = vpop.f32.mrb[0].mxu0
        %1235 = vmatprep.mubr.f32.mxu0 0.0
        %v1236 = vand.u32 %v779, 4294901760
        %1237 = vmatmul.mubr.f32.gmra.mrb[0].mxu0 %v1236
        %v1238 = vpop.f32.mrb[0].mxu0
        %v1239 = vadd.f32 %v1148, %v1238
        %v1240 = vpop.f32.mrb[0].mxu0
        %1241 = vmatprep.mubr.f32.mxu0 0.0
        %v1242 = vand.u32 %v782, 4294901760
        %1243 = vmatmul.mubr.f32.gmra.mrb[0].mxu0 %v1242
        %v1244 = vpop.f32.mrb[0].mxu0
        %v1245 = vadd.f32 %v1156, %v1244
        %v1246 = vpop.f32.mrb[0].mxu0
        %1247 = vdwg.mxu0
        %1248 = vmatprep.subr.mxu0 0.0
        %v1249 = vand.u32 %v772, 4294901760
        %1250 = vmatpush1.msra.mxu0 %v1249
        %1251 = vmatprep.subr.mxu0 0.0
        %v1252 = vand.u32 %v786, 4294901760
        %1253 = vmatpush1.msra.mxu0 %v1252
        %1254 = vmatprep.subr.mxu0 0.0
        %1255 = vmatpush1.msra.mxu0 0.0
        %1256 = vmatprep.subr.mxu0 0.0
        %1257 = vmatpush1.msra.mxu0 0.0
        %1258 = vmatprep.subr.mxu0 0.0
        %1259 = vmatpush1.msra.mxu0 0.0
        %1260 = vmatprep.subr.mxu0 0.0
        %1261 = vmatpush1.msra.mxu0 0.0
        %1262 = vmatprep.subr.mxu0 0.0
        %1263 = vmatpush1.msra.mxu0 0.0
        %1264 = vmatprep.subr.mxu0 0.0
        %1265 = vmatpush1.msra.mxu0 0.0
        %1266 = vmatprep.subr.mxu0 0.0
        %1267 = vmatpush1.msra.mxu0 0.0
        %1268 = vmatprep.subr.mxu0 0.0
        %1269 = vmatpush1.msra.mxu0 0.0
        %1270 = vmatprep.subr.mxu0 0.0
        %1271 = vmatpush1.msra.mxu0 0.0
        %1272 = vmatprep.subr.mxu0 0.0
        %1273 = vmatpush1.msra.mxu0 0.0
        %1274 = vmatprep.subr.mxu0 0.0
        %1275 = vmatpush1.msra.mxu0 0.0
        %1276 = vmatprep.subr.mxu0 0.0
        %1277 = vmatpush1.msra.mxu0 0.0
        %1278 = vmatprep.subr.mxu0 0.0
        %1279 = vmatpush1.msra.mxu0 0.0
        %1280 = vmatprep.subr.mxu0 0.0
        %1281 = vmatpush1.msra.mxu0 0.0
        %1282 = vmatprep.subr.mxu0 0.0
        %1283 = vmatpush1.msra.mxu0 0.0
        %1284 = vmatprep.subr.mxu0 0.0
        %1285 = vmatpush1.msra.mxu0 0.0
        %1286 = vmatprep.subr.mxu0 0.0
        %1287 = vmatpush1.msra.mxu0 0.0
        %1288 = vmatprep.subr.mxu0 0.0
        %1289 = vmatpush1.msra.mxu0 0.0
        %1290 = vmatprep.subr.mxu0 0.0
        %1291 = vmatpush1.msra.mxu0 0.0
        %1292 = vmatprep.subr.mxu0 0.0
        %1293 = vmatpush1.msra.mxu0 0.0
        %1294 = vmatprep.subr.mxu0 0.0
        %1295 = vmatpush1.msra.mxu0 0.0
        %1296 = vmatprep.subr.mxu0 0.0
        %1297 = vmatpush1.msra.mxu0 0.0
        %1298 = vmatprep.subr.mxu0 0.0
        %1299 = vmatpush1.msra.mxu0 0.0
        %1300 = vmatprep.subr.mxu0 0.0
        %1301 = vmatpush1.msra.mxu0 0.0
        %1302 = vmatprep.subr.mxu0 0.0
        %1303 = vmatpush1.msra.mxu0 0.0
        %1304 = vmatprep.subr.mxu0 0.0
        %1305 = vmatpush1.msra.mxu0 0.0
        %1306 = vmatprep.subr.mxu0 0.0
        %1307 = vmatpush1.msra.mxu0 0.0
        %1308 = vmatprep.subr.mxu0 0.0
        %1309 = vmatpush1.msra.mxu0 0.0
        %1310 = vmatprep.subr.mxu0 0.0
        %1311 = vmatpush1.msra.mxu0 0.0
        %1312 = vmatprep.subr.mxu0 0.0
        %1313 = vmatpush1.msra.mxu0 0.0
        %1314 = vmatprep.mubr.f32.mxu0 0.0
        %v1315 = vand.u32 %v776, 4294901760
        %1316 = vmatmul.mubr.f32.gmra.mrb[0].mxu0 %v1315
        %v1317 = vpop.f32.mrb[0].mxu0
        %v1318 = vadd.f32 %v1233, %v1317
        %v1319 = vpop.f32.mrb[0].mxu0
        %1320 = vmatprep.mubr.f32.mxu0 0.0
        %v1321 = vand.u32 %v779, 4294901760
        %1322 = vmatmul.mubr.f32.gmra.mrb[0].mxu0 %v1321
        %v1323 = vpop.f32.mrb[0].mxu0
        %v1324 = vadd.f32 %v1239, %v1323
        %v1325 = vpop.f32.mrb[0].mxu0
        %1326 = vmatprep.mubr.f32.mxu0 0.0
        %v1327 = vand.u32 %v782, 4294901760
        %1328 = vmatmul.mubr.f32.gmra.mrb[0].mxu0 %v1327
        %v1329 = vpop.f32.mrb[0].mxu0
        %v1330 = vadd.f32 %v1245, %v1329
        %v1331 = vpop.f32.mrb[0].mxu0
        %1332 = vdwg.mxu0
        %v1333 = vfloor.f32 %v1318
        %v1334 = vfloor.f32 %v1324
        %v1335 = vfloor.f32 %v1330
        %v1336 = vmax.f32 %v1333, 0.0
        %v1337 = vmax.f32 %v1334, 0.0
        %v1338 = vmax.f32 %v1335, 0.0
        %v1339 = vmin.f32 %v1336, 255.0
        %v1340 = vmin.f32 %v1337, 255.0
        %v1341 = vmin.f32 %v1338, 255.0
        %v1342 = vcvt.f32.s32.to.zero.pseudo %v1339
        %v1343 = vcvt.f32.s32.to.zero.pseudo %v1340
        %v1344 = vcvt.f32.s32.to.zero.pseudo %v1341
        %v1345 = vpack.c.b16 %v1342, %v1342
        %v1346 = vpack.c.b8 %v1345, %v1345
        %v1347 = vpack.c.b16 %v1343, %v1343
        %v1348 = vpack.c.b8 %v1347, %v1347
        %v1349 = vpack.c.b16 %v1344, %v1344
        %v1350 = vpack.c.b8 %v1349, %v1349
        %vm1351 = vcmask 140288
        %1352 = vst.msk [vmem:[%s193] sm:$0x3] %vm1351, %v1346
        %1353 = vst.msk [vmem:[%s193 + $0x2] sm:$0x3] %vm1351, %v1348
        %1354 = vst.msk [vmem:[%s193 + $0x4] sm:$0x3] %vm1351, %v1350
        %s1355 = sand.u32 %s112, 1
        %s1356 = scalar_lea.sflag [#allocation3], %s1355
        %s1357 = sand.u32 %s112, 1
        %s1358 = smul.addr %s1357, 6
        %s1359 = scalar_lea.vmem [#allocation2], %s1358
        // Predicated region
        $region33: #{tpu_custom_call.1} parent=31 // pred_check
          %p1360 = pneg %p122
        $region34: #{tpu_custom_call.1} parent=31 // pred_check_branch
          %1362 = sbr.rel (%p1360) target = $region36
        $region35: #{tpu_custom_call.1} parent=31 // pred_region
          %s1363 = smul.u32 3, %s22
          %s1365 = ssub.s32 96, 96
          %1366 = vsyncadd %s1356, %s1365
          %s1367 = smul.addr %s21, 3
          %s1368 = sadd.s32 %s1363, %s1367
          %s1369 = smul.addr %s1368, 32
          %s1370 = scalar_lea.hbm %s3, %s1369
          %s1371 = sshll.u32 %s1359, 4
          %s1372 = int_to_ptr.vmem [resolvable:$true] %s1371
          %1377 = dma.vmem_to_hbm [thread:$0]  %s1372, 96, %s1370, %s1356, 32, 32, 2
        $region36: #{tpu_custom_call.1} parent=31 // pred_fallthru
          _
      $region32: #{tpu_custom_call.1} parent=5 // pred_fallthru
        _
      %p1378 = scmp.le.s32.totalorder 2, %s12
      // Predicated region
      $region37: #{tpu_custom_call.1} parent=5 // pred_check
        %p1379 = pneg %p1378
      $region38: #{tpu_custom_call.1} parent=5 // pred_check_branch
        %1381 = sbr.rel (%p1379) target = $region40
      $region39: #{tpu_custom_call.1} parent=5 // pred_region
        %s1382 = ssub.s32 %s12, 2
        // Predicated region
        $region41: #{tpu_custom_call.1} parent=39 // pred_check
          %p1383 = pneg %p128
        $region42: #{tpu_custom_call.1} parent=39 // pred_check_branch
          %1385 = sbr.rel (%p1383) target = $region44
        $region43: #{tpu_custom_call.1} parent=39 // pred_region
          %s1386 = sand.u32 %s113, 1
          %s1387 = scalar_lea.sflag [#allocation3], %s1386
          %s1388 = sand.u32 %s113, 1
          %s1389 = smul.addr %s1388, 6
          %s1390 = scalar_lea.vmem [#allocation2], %s1389
          %1391 = dma.done %s1387, 96
        $region44: #{tpu_custom_call.1} parent=39 // pred_fallthru
          _
      $region40: #{tpu_custom_call.1} parent=5 // pred_fallthru
        _
    $region6: #{tpu_custom_call.1} parent=1 // loop_footer
      %s16 = sadd.s32 1, %s12
    $region7: #{tpu_custom_call.1} parent=1 // loop_footer_branch
      %11 = sbr.rel target = $region3
    $region8: #{tpu_custom_call.1} parent=1 // loop_exit
      _
    %1392 = vsyncpa [#allocation3], 1
    %s1393 = scalar_lea.sflag [#allocation3], 1
    %1394 = vsyncpa %s1393, 1

</llo_original>
